<compile_context>
chip_gen: v7x
topology: tpu7x:2x2x1
jax: 0.10.0
libtpu: 0.0.40
codegen_flags: <defaults>
</compile_context>

<pallas_src>
import functools

import jax
import jax.numpy as jnp
from jax.experimental import pallas as pl
from jax.experimental.pallas import tpu as pltpu


def _round_up(x, n):
    return ((x + n - 1) // n) * n


def _lin_kernel(src_ref, wcat_ref, wdb_ref, o_ref):
    # src_ref : (tm, 2)            f32  col 0 = action index (as float), col 1 = duration
    # wcat_ref: (input_dim_pad, hidp) f32  Linear weight rows for the one-hot part
    # wdb_ref : (2, hidp)          f32  row 0 = duration-column weight, row 1 = bias
    # o_ref   : (tm, hidp)
    tm = src_ref.shape[0]
    in_pad = wcat_ref.shape[0]

    s = src_ref[...]                                 # (tm, 2)
    idx = s[:, 0:1].astype(jnp.int32)                # (tm, 1) action index
    dur = s[:, 1:2]                                  # (tm, 1) duration

    # Build the one-hot block in registers (never materialized in HBM).
    classes = jax.lax.broadcasted_iota(jnp.int32, (tm, in_pad), 1)
    onehot = (classes == idx).astype(jnp.float32)    # padded columns never match -> 0

    # one_hot @ W[:input_dim] on the MXU, f32 accumulation.
    y = jnp.dot(onehot, wcat_ref[...], preferred_element_type=jnp.float32)
    # Concatenated duration column == rank-1 update, plus bias (VPU).
    y = y + dur * wdb_ref[0:1, :] + wdb_ref[1:2, :]

    o_ref[...] = y.astype(o_ref.dtype)


@functools.partial(jax.jit, static_argnames=("tm",))
def lin_forward(src, w, b, *, tm=512):
    """LIN.forward.

    src: [batch, seq, 2]  (last dim = [action_index_as_float, action_duration])
    w  : [input_dim + 1, hid]  nn.Linear weight, pre-transposed to (in, out)
         (PyTorch stores nn.Linear.weight as (out, in) -- transpose it first!)
    b  : [hid]
    returns: [batch, seq, hid]
    """
    batch, seq, feat = src.shape
    assert feat == 2, "src last dim must be [action_index, duration]"
    in_p1, hid = w.shape
    assert b.shape == (hid,), "w must be pre-transposed to (input_dim + 1, hid)"
    input_dim = in_p1 - 1
    m = batch * seq

    # Alignment: lane-dense output width, sublane-aligned MXU K, row tile.
    hidp = _round_up(hid, 128)
    in_pad = _round_up(input_dim, 8)
    tm_eff = min(tm, _round_up(m, 8))        # multiple of 8, never wastefully large
    grid_m = pl.cdiv(m, tm_eff)              # ragged last block handled by Pallas

    # Single (m, 2) input stream; no host-side gathers / pads on the row axis.
    src2 = src.reshape(m, 2).astype(jnp.float32)

    # Resident weights: one-hot part + fused [duration weight; bias].
    wcat = w[:input_dim, :]                                          # (input_dim, hid)
    wdb = jnp.concatenate([w[input_dim:, :], b.reshape(1, hid)], 0)  # (2, hid)
    if in_pad != input_dim:
        wcat = jnp.pad(wcat, ((0, in_pad - input_dim), (0, 0)))
    if hidp != hid:
        wcat = jnp.pad(wcat, ((0, 0), (0, hidp - hid)))
        wdb = jnp.pad(wdb, ((0, 0), (0, hidp - hid)))

    cost = pl.CostEstimate(
        flops=2 * m * (in_pad + 1) * hidp,
        transcendentals=0,
        bytes_accessed=(m * 2 * 4                 # src
                        + in_pad * hidp * 4       # resident weight slab
                        + 2 * hidp * 4            # fused dur-weight + bias
                        + m * hidp * 4),          # output (dominant term)
    )

    # Explicit VMEM budget (double-buffered inputs + output tile) with slack.
    vmem_bytes = 2 * 4 * (tm_eff * 2 + in_pad * hidp + 2 * hidp + tm_eff * hidp)
    vmem_limit = int(min(max(vmem_bytes + (2 << 20), 32 << 20), 64 << 20))

    out2d = pl.pallas_call(
        _lin_kernel,
        out_shape=jax.ShapeDtypeStruct((m, hidp), w.dtype),
        grid_spec=pltpu.PrefetchScalarGridSpec(
            num_scalar_prefetch=0,
            grid=(grid_m,),
            in_specs=[
                pl.BlockSpec((tm_eff, 2), lambda i: (i, 0)),        # src row-tile
                pl.BlockSpec((in_pad, hidp), lambda i: (0, 0)),     # W[:input_dim] (resident)
                pl.BlockSpec((2, hidp), lambda i: (0, 0)),          # [W_dur; bias] (resident)
            ],
            out_specs=pl.BlockSpec((tm_eff, hidp), lambda i: (i, 0)),
        ),
        compiler_params=pltpu.CompilerParams(
            dimension_semantics=("parallel",),
            vmem_limit_bytes=vmem_limit,
        ),
        cost_estimate=cost,
    )(src2, wcat, wdb)

    if hidp != hid:                 # only in the (uncommon) non-128-multiple case
        out2d = out2d[:, :hid]
    return out2d.reshape(batch, seq, hid)


def _reference(src, w, b):
    input_dim = w.shape[0] - 1
    idx = src[..., 0].astype(jnp.int32)
    onehot = jax.nn.one_hot(idx, input_dim, dtype=jnp.float32)
    x = jnp.concatenate([onehot, src[..., -1:]], axis=-1)
    return jnp.dot(x, w) + b


if __name__ == "__main__":
    batch, seq = 2, 8
    input_dim, hid_dim = 16, 32

    key = jax.random.PRNGKey(0)
    ka, kd, kw, kb = jax.random.split(key, 4)

    # src[..., 0] = action index (stored as float, as in the PyTorch module),
    # src[..., 1] = action duration.
    actions = jax.random.randint(ka, (batch, seq, 1), 0, input_dim).astype(jnp.float32)
    durations = jax.random.uniform(kd, (batch, seq, 1), jnp.float32, 0.0, 5.0)
    src = jnp.concatenate([actions, durations], axis=-1)            # [2, 8, 2]

    # Deterministic nn.Linear-style init, stored pre-transposed (in, out).
    bound = 1.0 / ((input_dim + 1) ** 0.5)
    w = jax.random.uniform(kw, (input_dim + 1, hid_dim), jnp.float32, -bound, bound)
    b = jax.random.uniform(kb, (hid_dim,), jnp.float32, -bound, bound)

    out = lin_forward(src, w, b)
    out = jax.block_until_ready(out)

    ref = _reference(src, w, b)
    assert out.shape == (batch, seq, hid_dim)
    assert jnp.allclose(out, ref, atol=1e-5, rtol=1e-5), "mismatch vs reference"

    print("KERNEL_OK")
</pallas_src>

<mosaic_0001>
module attributes {stable_mosaic.version = 11 : i64} {
  func.func @_lin_kernel(%arg0: i32, %arg1: memref<16x2xf32, #tpu.memory_space<vmem>>, %arg2: memref<16x128xf32, #tpu.memory_space<vmem>>, %arg3: memref<2x128xf32, #tpu.memory_space<vmem>>, %arg4: memref<16x128xf32, #tpu.memory_space<vmem>>) attributes {dimension_semantics = [#tpu.dimension_semantics<parallel>], iteration_bounds = array<i64: 1>, scalar_prefetch = 0 : i64, scratch_operands = 0 : i64, tpu.core_type = #tpu.core_type<tc>, window_params = [{transform_indices = @transform_0, window_bounds = array<i64: 16, 2>}, {pipeline_mode = #tpu.pipeline_mode<synchronous>, transform_indices = @transform_1, window_bounds = array<i64: 16, 128>}, {pipeline_mode = #tpu.pipeline_mode<synchronous>, transform_indices = @transform_2, window_bounds = array<i64: 2, 128>}, {transform_indices = @transform_3, window_bounds = array<i64: 16, 128>}]} {
    %c0 = arith.constant 0 : index
    %c0_0 = arith.constant 0 : index
    %0 = vector.load %arg1[%c0, %c0_0] : memref<16x2xf32, #tpu.memory_space<vmem>>, vector<16x2xf32>
    %1 = vector.extract_strided_slice %0 {offsets = [0, 0], sizes = [16, 1], strides = [1, 1]} : vector<16x2xf32> to vector<16x1xf32>
    %2 = arith.fptosi %1 : vector<16x1xf32> to vector<16x1xi32>
    %3 = vector.extract_strided_slice %0 {offsets = [0, 1], sizes = [16, 1], strides = [1, 1]} : vector<16x2xf32> to vector<16x1xf32>
    %4 = tpu.iota {dimensions = array<i32: 1>} : vector<16x16xi32>
    %5 = vector.broadcast %2 : vector<16x1xi32> to vector<16x16xi32>
    %6 = arith.cmpi eq, %4, %5 : vector<16x16xi32>
    %7 = arith.extui %6 : vector<16x16xi1> to vector<16x16xi32>
    %8 = arith.sitofp %7 : vector<16x16xi32> to vector<16x16xf32>
    %c0_1 = arith.constant 0 : index
    %c0_2 = arith.constant 0 : index
    %9 = vector.load %arg2[%c0_1, %c0_2] : memref<16x128xf32, #tpu.memory_space<vmem>>, vector<16x128xf32>
    %cst = arith.constant dense<0.000000e+00> : vector<16x128xf32>
    %10 = tpu.matmul %8, %9, %cst {dimension_numbers = #tpu.dot_dimension_numbers<[1], [0], [0], [1], [0, 0, 1, 1], [], []>} : vector<16x16xf32>, vector<16x128xf32>, vector<16x128xf32> -> vector<16x128xf32>
    %c0_3 = arith.constant 0 : index
    %c0_4 = arith.constant 0 : index
    %11 = vector.load %arg3[%c0_3, %c0_4] : memref<2x128xf32, #tpu.memory_space<vmem>>, vector<1x128xf32>
    %12 = vector.broadcast %3 : vector<16x1xf32> to vector<16x128xf32>
    %13 = vector.broadcast %11 : vector<1x128xf32> to vector<16x128xf32>
    %14 = arith.mulf %12, %13 : vector<16x128xf32>
    %15 = arith.addf %10, %14 : vector<16x128xf32>
    %c1 = arith.constant 1 : index
    %c0_5 = arith.constant 0 : index
    %16 = vector.load %arg3[%c1, %c0_5] : memref<2x128xf32, #tpu.memory_space<vmem>>, vector<1x128xf32>
    %17 = vector.broadcast %16 : vector<1x128xf32> to vector<16x128xf32>
    %18 = arith.addf %15, %17 : vector<16x128xf32>
    %c0_6 = arith.constant 0 : index
    %c0_7 = arith.constant 0 : index
    %19 = vector.load %arg4[%c0_6, %c0_7] : memref<16x128xf32, #tpu.memory_space<vmem>>, vector<16x128xf32>
    tpu.vector_store %arg4[%c0_6, %c0_7], %18 {strides = array<i32>} : memref<16x128xf32, #tpu.memory_space<vmem>>, vector<16x128xf32>,
    return
  }
  func.func @transform_0(%arg0: i32) -> (i32, i32) {
    %c0_i32 = arith.constant 0 : i32
    %c0_i32_0 = arith.constant 0 : i32
    return %arg0, %c0_i32 : i32, i32
  }
  func.func @transform_1(%arg0: i32) -> (i32, i32) {
    %c0_i32 = arith.constant 0 : i32
    %c0_i32_0 = arith.constant 0 : i32
    %c0_i32_1 = arith.constant 0 : i32
    return %c0_i32, %c0_i32_0 : i32, i32
  }
  func.func @transform_2(%arg0: i32) -> (i32, i32) {
    %c0_i32 = arith.constant 0 : i32
    %c0_i32_0 = arith.constant 0 : i32
    %c0_i32_1 = arith.constant 0 : i32
    return %c0_i32, %c0_i32_0 : i32, i32
  }
  func.func @transform_3(%arg0: i32) -> (i32, i32) {
    %c0_i32 = arith.constant 0 : i32
    %c0_i32_0 = arith.constant 0 : i32
    return %arg0, %c0_i32 : i32, i32
  }
}

</mosaic_0001>

<llo_original>
// kernel: lin_forward.1
$region0: #{lin_forward.1}
  #allocation0 [shape = 'u32[]', space=smem, size = 0x4, offset = 0x4, fixed_abs, tag = 'smem constant byte address 0x4 - core index']
  #allocation1 [shape = 'u32[144,128]{1,0:T(1,128)}', space=vmem, size = 0x12000, scoped, tag = 'internal scratch']
  %s0 = inlined_call_operand.vmem [shape: f32[16,2], index: 0, kind: input, shape index: {}]
  %s1 = inlined_call_operand.vmem [shape: f32[16,128], index: 1, kind: input, shape index: {}]
  %s2 = inlined_call_operand.vmem [shape: f32[2,128], index: 2, kind: input, shape index: {}]
  %s3 = inlined_call_operand.vmem [shape: f32[16,128], index: 3, kind: output, shape index: {}]
  %s4 = sld [smem:[#allocation0]]
  $region22: #{lin_forward.1} parent=0
    _
  %s6 = ssub.s32 1, %s4
  %s7 = scalar_select 0, %s6, %s4
  // Predicated region
  $region2: #{lin_forward.1} parent=0 // pred_check
    _
  $region3: #{lin_forward.1} parent=0 // pred_check_branch
    %9 = sbr.rel (0) target = $region5
  $region4: #{lin_forward.1} parent=0 // pred_region
    _
  $region5: #{lin_forward.1} parent=0 // pred_fallthru
    _
  // Predicated region
  $region6: #{lin_forward.1} parent=0 // pred_check
    _
  $region7: #{lin_forward.1} parent=0 // pred_check_branch
    %11 = sbr.rel (0) target = $region9
  $region8: #{lin_forward.1} parent=0 // pred_region
    _
  $region9: #{lin_forward.1} parent=0 // pred_fallthru
    _
  // Predicated region
  $region10: #{lin_forward.1} parent=0 // pred_check
    _
  $region11: #{lin_forward.1} parent=0 // pred_check_branch
    %13 = sbr.rel (0) target = $region13
  $region12: #{lin_forward.1} parent=0 // pred_region
    _
  $region13: #{lin_forward.1} parent=0 // pred_fallthru
    _
  %v14 = vld [vmem:[%s0] sm:$0xff]
  %v15 = vld [vmem:[%s0 + $0x8] sm:$0xff]
  %v16 = vcvt.f32.s32.to.zero.pseudo %v14
  %v17 = vcvt.f32.s32.to.zero.pseudo %v15
  %v18 = vlaneseq
  %v19 = vand.u32 %v18, 127
  %20 = vset.pattern.permute.xlu0 0
  %21 = vperm.xlu0 %20, %v16
  %v22 = vpop.permute.xlu0 %21
  %23 = vset.pattern.permute.xlu0 0
  %24 = vperm.xlu0 %23, %v17
  %v25 = vpop.permute.xlu0 %24
  %vm26 = vcmp.eq.s32.totalorder %v19, %v22
  %vm27 = vcmp.eq.s32.totalorder %v19, %v25
  %v28 = vsel %vm26, 1, 0
  %v29 = vsel %vm27, 1, 0
  %v30 = vcvt.s32.f32 %v28
  %v31 = vcvt.s32.f32 %v29
  %v32 = vld [vmem:[%s1] sm:$0xff]
  %v33 = vld [vmem:[%s1 + $0x8] sm:$0xff]
  %v34 = vld [vmem:[%s2] sm:$0x1]
  %36 = vset.pattern.permute.xlu0 1
  %37 = vperm.xlu0 %36, %v14
  %v38 = vpop.permute.xlu0 %37
  %41 = vset.pattern.permute.xlu0 1
  %42 = vperm.xlu0 %41, %v15
  %v43 = vpop.permute.xlu0 %42
  %v45 = vlaneseq
  %v46 = vshrl.u32 %v45, 7
  %v47 = vsub.s32 0, %v46
  %v48 = vrot.slane %v34, %v47
  %v49 = vmul.f32 %v38, %v48
  %v50 = vmul.f32 %v43, %v48
  %vm51 = vcmask 130048
  %v53 = vsel %vm51, %v30, 0
  %v56 = vsel %vm51, %v31, 0
  %58 = vmatprep.subr.mxu0 0.0
  %59 = vmatpush1.msra.mxu0 %v32
  %60 = vmatprep.subr.mxu0 0.0
  %61 = vmatpush1.msra.mxu0 %v33
  %62 = vmatprep.subr.mxu0 0.0
  %63 = vmatpush1.msra.mxu0 0.0
  %64 = vmatprep.subr.mxu0 0.0
  %65 = vmatpush1.msra.mxu0 0.0
  %66 = vmatprep.subr.mxu0 0.0
  %67 = vmatpush1.msra.mxu0 0.0
  %68 = vmatprep.subr.mxu0 0.0
  %69 = vmatpush1.msra.mxu0 0.0
  %70 = vmatprep.subr.mxu0 0.0
  %71 = vmatpush1.msra.mxu0 0.0
  %72 = vmatprep.subr.mxu0 0.0
  %73 = vmatpush1.msra.mxu0 0.0
  %74 = vmatprep.subr.mxu0 0.0
  %75 = vmatpush1.msra.mxu0 0.0
  %76 = vmatprep.subr.mxu0 0.0
  %77 = vmatpush1.msra.mxu0 0.0
  %78 = vmatprep.subr.mxu0 0.0
  %79 = vmatpush1.msra.mxu0 0.0
  %80 = vmatprep.subr.mxu0 0.0
  %81 = vmatpush1.msra.mxu0 0.0
  %82 = vmatprep.subr.mxu0 0.0
  %83 = vmatpush1.msra.mxu0 0.0
  %84 = vmatprep.subr.mxu0 0.0
  %85 = vmatpush1.msra.mxu0 0.0
  %86 = vmatprep.subr.mxu0 0.0
  %87 = vmatpush1.msra.mxu0 0.0
  %88 = vmatprep.subr.mxu0 0.0
  %89 = vmatpush1.msra.mxu0 0.0
  %90 = vmatprep.subr.mxu0 0.0
  %91 = vmatpush1.msra.mxu0 0.0
  %92 = vmatprep.subr.mxu0 0.0
  %93 = vmatpush1.msra.mxu0 0.0
  %94 = vmatprep.subr.mxu0 0.0
  %95 = vmatpush1.msra.mxu0 0.0
  %96 = vmatprep.subr.mxu0 0.0
  %97 = vmatpush1.msra.mxu0 0.0
  %98 = vmatprep.subr.mxu0 0.0
  %99 = vmatpush1.msra.mxu0 0.0
  %100 = vmatprep.subr.mxu0 0.0
  %101 = vmatpush1.msra.mxu0 0.0
  %102 = vmatprep.subr.mxu0 0.0
  %103 = vmatpush1.msra.mxu0 0.0
  %104 = vmatprep.subr.mxu0 0.0
  %105 = vmatpush1.msra.mxu0 0.0
  %106 = vmatprep.subr.mxu0 0.0
  %107 = vmatpush1.msra.mxu0 0.0
  %108 = vmatprep.subr.mxu0 0.0
  %109 = vmatpush1.msra.mxu0 0.0
  %110 = vmatprep.subr.mxu0 0.0
  %111 = vmatpush1.msra.mxu0 0.0
  %112 = vmatprep.subr.mxu0 0.0
  %113 = vmatpush1.msra.mxu0 0.0
  %114 = vmatprep.subr.mxu0 0.0
  %115 = vmatpush1.msra.mxu0 0.0
  %116 = vmatprep.subr.mxu0 0.0
  %117 = vmatpush1.msra.mxu0 0.0
  %118 = vmatprep.subr.mxu0 0.0
  %119 = vmatpush1.msra.mxu0 0.0
  %120 = vmatprep.subr.mxu0 0.0
  %121 = vmatpush1.msra.mxu0 0.0
  %122 = vmatprep.mubr.f32.mxu0 0.0
  %123 = vmatmul.mubr.f32.gmra.mrb[0].mxu0 %v53
  %v124 = vpop.f32.mrb[0].mxu0
  %v125 = vadd.f32 %v49, %v124
  %v126 = vpop.f32.mrb[0].mxu0
  %127 = vmatprep.mubr.f32.mxu0 0.0
  %128 = vmatmul.mubr.f32.gmra.mrb[0].mxu0 %v56
  %v129 = vpop.f32.mrb[0].mxu0
  %v130 = vadd.f32 %v50, %v129
  %v131 = vpop.f32.mrb[0].mxu0
  %132 = vdwg.mxu0
  %v133 = vld [vmem:[%s2 + $0x1] sm:$0x1]
  %v134 = vlaneseq
  %v135 = vshrl.u32 %v134, 7
  %v136 = vsub.s32 0, %v135
  %v137 = vrot.slane %v133, %v136
  %v138 = vadd.f32 %v125, %v137
  %v139 = vadd.f32 %v130, %v137
  %140 = vst [vmem:[%s3] sm:$0xff] %v138
  %141 = vst [vmem:[%s3 + $0x8] sm:$0xff] %v139
  // Predicated region
  $region14: #{lin_forward.1} parent=0 // pred_check
    _
  $region15: #{lin_forward.1} parent=0 // pred_check_branch
    %143 = sbr.rel (0) target = $region17
  $region16: #{lin_forward.1} parent=0 // pred_region
    _
  $region17: #{lin_forward.1} parent=0 // pred_fallthru
    _
  // Predicated region
  $region18: #{lin_forward.1} parent=0 // pred_check
    _
  $region19: #{lin_forward.1} parent=0 // pred_check_branch
    %145 = sbr.rel (0) target = $region21
  $region20: #{lin_forward.1} parent=0 // pred_region
    _
  $region21: #{lin_forward.1} parent=0 // pred_fallthru
    _

</llo_original>
